<compile_context>
chip_gen: v6e
topology: v6e:2x2x1
jax: 0.10.0
libtpu: 0.0.40
codegen_flags: <defaults>
</compile_context>

<pallas_src>
import functools

import jax
import jax.numpy as jnp
from jax.experimental import pallas as pl
from jax.experimental.pallas import tpu as pltpu


def _round_up(v: int, m: int) -> int:
    return ((v + m - 1) // m) * m


def _dropout_hwprng_kernel(seed_ref, x_ref, o_ref, *, threshold, scale):
    """TPU path: hardware PRNG bits + uint32 threshold compare + select."""
    # Re-seed per grid step so every tile (and every TensorCore under a
    # "parallel" grid axis) draws an independent mask.
    pltpu.prng_seed(seed_ref[0], pl.program_id(0))
    bits = pltpu.bitcast(pltpu.prng_random_bits(x_ref.shape), jnp.uint32)
    keep = bits >= jnp.uint32(threshold)
    o_ref[...] = jnp.where(keep, x_ref[...] * scale, 0.0).astype(o_ref.dtype)


def _dropout_bits_kernel(x_ref, bits_ref, o_ref, *, threshold, scale):
    """Portable path: random bits are a regular tiled input."""
    keep = bits_ref[...] >= jnp.uint32(threshold)
    o_ref[...] = jnp.where(keep, x_ref[...] * scale, 0.0).astype(o_ref.dtype)


def _dropout_forward(x: jax.Array, p: float, seed: int) -> jax.Array:
    orig_shape = x.shape
    orig_dtype = x.dtype
    n = x.size

    # keep iff bits >= round(p * 2^32)  =>  P(keep) = 1 - p  (full 32-bit mask).
    threshold = min(max(int(round(p * 4294967296.0)), 0), 4294967295)
    scale = 1.0 / (1.0 - p)

    # Flatten to a lane-dense 2D slab.  Wide lane dim (1024) for real-size
    # inputs → long unmasked vst; narrow (128) for tiny inputs to limit the
    # padding overhead.  Pad to a multiple of (8 * lane) so the row count is a
    # multiple of 8 and every block is a clean multiple of the (8,128) tile.
    lane = 1024 if n >= 8 * 1024 else 128
    padded = _round_up(n, lane * 8)
    flat = x.reshape(-1)
    if padded != n:
        flat = jnp.pad(flat, (0, padded - n))
    rows = padded // lane
    x2d = flat.reshape(rows, lane)

    # ~2 MiB input block per grid step (with double-buffered in + out that is
    # ~8 MiB VMEM, well under scoped VMEM on v5e/v6e/v7x), rows multiple of 8.
    dsize = x2d.dtype.itemsize
    tile_rows = max(8, ((2 << 20) // (lane * dsize)) // 8 * 8)
    tile_rows = min(tile_rows, rows)
    num_blocks = pl.cdiv(rows, tile_rows)
    blk = (tile_rows, lane)

    if jax.default_backend() == "tpu":
        kernel = functools.partial(
            _dropout_hwprng_kernel, threshold=threshold, scale=scale)
        seed_arr = jnp.array([seed], dtype=jnp.int32)
        out2d = pl.pallas_call(
            kernel,
            out_shape=jax.ShapeDtypeStruct((rows, lane), orig_dtype),
            grid_spec=pltpu.PrefetchScalarGridSpec(
                num_scalar_prefetch=1,
                grid=(num_blocks,),
                in_specs=[pl.BlockSpec(blk, lambda i, s: (i, 0))],
                out_specs=pl.BlockSpec(blk, lambda i, s: (i, 0)),
            ),
            compiler_params=pltpu.CompilerParams(
                dimension_semantics=("parallel",)),
            cost_estimate=pl.CostEstimate(
                flops=2 * n, transcendentals=0,
                bytes_accessed=2 * n * dsize),
        )(seed_arr, x2d)
    else:
        # Non-TPU backend (e.g. CPU interpret): TPU PRNG primitives have no
        # lowering, so draw the bits with jax.random and tile them through the
        # kernel alongside x.  Mask math is identical.
        bits2d = jax.random.bits(
            jax.random.PRNGKey(seed), (rows, lane), dtype=jnp.uint32)
        kernel = functools.partial(
            _dropout_bits_kernel, threshold=threshold, scale=scale)
        out2d = pl.pallas_call(
            kernel,
            out_shape=jax.ShapeDtypeStruct((rows, lane), orig_dtype),
            grid=(num_blocks,),
            in_specs=[pl.BlockSpec(blk, lambda i: (i, 0)),
                      pl.BlockSpec(blk, lambda i: (i, 0))],
            out_specs=pl.BlockSpec(blk, lambda i: (i, 0)),
        )(x2d, bits2d)

    out_flat = out2d.reshape(-1)
    if padded != n:
        out_flat = out_flat[:n]
    return out_flat.reshape(orig_shape)


class CustomDropoutLayerGetShapePallas:
    """JAX/Pallas port of the PyTorch CustomDropoutLayerGetShape module."""

    def __init__(self, p: float):
        self.p = float(p)
        self.shape = None
        self.training = True

    def __call__(self, x: jax.Array, seed: int = 0) -> jax.Array:
        self.shape = x.shape  # mirror `self.shape = x.shape`
        if not self.training or self.p <= 0.0:
            return x
        # TODO(synk): torch.rand's exact RNG stream cannot be reproduced; the
        # mask is i.i.d. Bernoulli(1-p) but bitwise different from PyTorch.
        return _dropout_forward(x, self.p, seed)


if __name__ == "__main__":
    key = jax.random.PRNGKey(0)
    # Small NCHW input consistent with a typical conv feature map.
    x = jax.random.normal(key, (2, 4, 16, 16), dtype=jnp.float32)

    layer = CustomDropoutLayerGetShapePallas(p=0.5)
    layer.training = True
    y = layer(x, seed=42)
    y = jax.block_until_ready(y)

    # Sanity: shape recorded, output shape/dtype preserved, surviving elements
    # are scaled copies of the input (x / (1 - p)) or exactly zero.
    assert layer.shape == x.shape
    assert y.shape == x.shape and y.dtype == x.dtype
    kept = y != 0
    scale = 1.0 / (1.0 - layer.p)
    assert jnp.allclose(jnp.where(kept, y, 0.0),
                        jnp.where(kept, x * scale, 0.0), rtol=1e-6, atol=1e-6)
    # Roughly half the elements should survive at p=0.5.
    keep_frac = jnp.mean(kept.astype(jnp.float32))
    assert 0.3 < float(keep_frac) < 0.7

    # Eval mode is the identity.
    layer.training = False
    y_eval = jax.block_until_ready(layer(x))
    assert jnp.array_equal(y_eval, x)

    print("KERNEL_OK")
</pallas_src>

<mosaic_0001>
module attributes {stable_mosaic.version = 11 : i64} {
  func.func @_dropout_bits_kernel(%arg0: i32, %arg1: memref<16x128xf32, #tpu.memory_space<vmem>>, %arg2: memref<16x128xi32, #tpu.memory_space<vmem>>, %arg3: memref<16x128xf32, #tpu.memory_space<vmem>>) attributes {dimension_semantics = [#tpu.dimension_semantics<arbitrary>], iteration_bounds = array<i64: 1>, scalar_prefetch = 0 : i64, scratch_operands = 0 : i64, tpu.core_type = #tpu.core_type<tc>, window_params = [{transform_indices = @transform_0, window_bounds = array<i64: 16, 128>}, {transform_indices = @transform_1, window_bounds = array<i64: 16, 128>}, {transform_indices = @transform_2, window_bounds = array<i64: 16, 128>}]} {
    %c0 = arith.constant 0 : index
    %c0_0 = arith.constant 0 : index
    %0 = vector.load %arg2[%c0, %c0_0] : memref<16x128xi32, #tpu.memory_space<vmem>>, vector<16x128xi32>
    %c-2147483648_i32 = arith.constant -2147483648 : i32
    %1 = vector.broadcast %c-2147483648_i32 : i32 to vector<16x128xi32>
    %2 = arith.cmpi uge, %0, %1 : vector<16x128xi32>
    %c0_1 = arith.constant 0 : index
    %c0_2 = arith.constant 0 : index
    %3 = vector.load %arg1[%c0_1, %c0_2] : memref<16x128xf32, #tpu.memory_space<vmem>>, vector<16x128xf32>
    %cst = arith.constant 2.000000e+00 : f32
    %4 = vector.broadcast %cst : f32 to vector<16x128xf32>
    %5 = arith.mulf %3, %4 : vector<16x128xf32>
    %cst_3 = arith.constant 0.000000e+00 : f32
    %6 = vector.broadcast %cst_3 : f32 to vector<16x128xf32>
    %7 = arith.select %2, %5, %6 : vector<16x128xi1>, vector<16x128xf32>
    %c0_4 = arith.constant 0 : index
    %c0_5 = arith.constant 0 : index
    %8 = vector.load %arg3[%c0_4, %c0_5] : memref<16x128xf32, #tpu.memory_space<vmem>>, vector<16x128xf32>
    tpu.vector_store %arg3[%c0_4, %c0_5], %7 {strides = array<i32>} : memref<16x128xf32, #tpu.memory_space<vmem>>, vector<16x128xf32>,
    return
  }
  func.func @transform_0(%arg0: i32) -> (i32, i32) {
    %c0_i32 = arith.constant 0 : i32
    %c0_i32_0 = arith.constant 0 : i32
    return %arg0, %c0_i32 : i32, i32
  }
  func.func @transform_1(%arg0: i32) -> (i32, i32) {
    %c0_i32 = arith.constant 0 : i32
    %c0_i32_0 = arith.constant 0 : i32
    return %arg0, %c0_i32 : i32, i32
  }
  func.func @transform_2(%arg0: i32) -> (i32, i32) {
    %c0_i32 = arith.constant 0 : i32
    %c0_i32_0 = arith.constant 0 : i32
    return %arg0, %c0_i32 : i32, i32
  }
}

</mosaic_0001>

<llo_original>
// kernel: tpu_custom_call.1
$region0: #{tpu_custom_call.1}
  #allocation0 [shape = 'u32[]', space=smem, size = 0x4, offset = 0x4, fixed_abs, tag = 'smem constant byte address 0x4 - core index']
  #allocation1 [shape = 'u32[144,128]{1,0:T(1,128)}', space=vmem, size = 0x12000, scoped, tag = 'internal scratch']
  %s0 = inlined_call_operand.hbm [shape: f32[16,128], index: 0, kind: input, shape index: {}]
  %s1 = inlined_call_operand.hbm [shape: u32[16,128], index: 1, kind: input, shape index: {}]
  %s2 = inlined_call_operand.hbm [shape: f32[16,128], index: 2, kind: output, shape index: {}]
  %s3 = sld [smem:[#allocation0]]
  $region26: #{tpu_custom_call.1} parent=0
    _
  %s5 = ssub.s32 1, %s3
  %s6 = scalar_select 0, %s5, %s3
  $region1: #{tpu_custom_call.1} parent=0
    #allocation2 [shape = 'u8[8192]{0}', space=vmem, size = 0x2000, scoped, tag = 'input window, operand 0, single buffered']
    #allocation3 [shape = 's32[1]{0}', space=sflag, size = 0x4, scoped, tag = 'scoped memory for tpu_custom_call.1']
    #allocation4 [shape = 's32[1]{0}', space=sflag, size = 0x4, scoped, tag = 'scoped memory for tpu_custom_call.1']
    #allocation5 [shape = 'u8[8192]{0}', space=vmem, size = 0x2000, scoped, tag = 'input window, operand 1, single buffered']
    #allocation6 [shape = 's32[1]{0}', space=sflag, size = 0x4, scoped, tag = 'scoped memory for tpu_custom_call.1']
    #allocation7 [shape = 'u8[8192]{0}', space=vmem, size = 0x2000, scoped, tag = 'output window, operand 0, single buffered']
    %7 = vsyncpa [#allocation3], 0
    %8 = vsyncpa [#allocation6], 0
    %9 = vsyncpa [#allocation4], 0
    // Predicated region
    $region2: #{tpu_custom_call.1} parent=1 // pred_check
      _
    $region3: #{tpu_custom_call.1} parent=1 // pred_check_branch
      %11 = sbr.rel (0) target = $region5
    $region4: #{tpu_custom_call.1} parent=1 // pred_region
      %s13 = ssub.s32 256, 256
      %14 = vsyncadd [#allocation3], %s13
      %s15 = sshll.u32 [#allocation2], 4
      %s16 = int_to_ptr.vmem [resolvable:$true] %s15
      %21 = dma.hbm_to_vmem [thread:$0]  %s0, 256, %s16, [#allocation3], 128, 128, 8
    $region5: #{tpu_custom_call.1} parent=1 // pred_fallthru
      _
    // Predicated region
    $region6: #{tpu_custom_call.1} parent=1 // pred_check
      _
    $region7: #{tpu_custom_call.1} parent=1 // pred_check_branch
      %23 = sbr.rel (0) target = $region9
    $region8: #{tpu_custom_call.1} parent=1 // pred_region
      %s25 = ssub.s32 256, 256
      %26 = vsyncadd [#allocation6], %s25
      %s27 = sshll.u32 [#allocation5], 4
      %s28 = int_to_ptr.vmem [resolvable:$true] %s27
      %33 = dma.hbm_to_vmem [thread:$0]  %s1, 256, %s28, [#allocation6], 128, 128, 8
    $region9: #{tpu_custom_call.1} parent=1 // pred_fallthru
      _
    // Predicated region
    $region10: #{tpu_custom_call.1} parent=1 // pred_check
      _
    $region11: #{tpu_custom_call.1} parent=1 // pred_check_branch
      %35 = sbr.rel (0) target = $region13
    $region12: #{tpu_custom_call.1} parent=1 // pred_region
      %36 = dma.done [#allocation3], 256
    $region13: #{tpu_custom_call.1} parent=1 // pred_fallthru
      _
    // Predicated region
    $region14: #{tpu_custom_call.1} parent=1 // pred_check
      _
    $region15: #{tpu_custom_call.1} parent=1 // pred_check_branch
      %38 = sbr.rel (0) target = $region17
    $region16: #{tpu_custom_call.1} parent=1 // pred_region
      %39 = dma.done [#allocation6], 256
    $region17: #{tpu_custom_call.1} parent=1 // pred_fallthru
      _
    %v40 = vld [vmem:[#allocation5] sm:$0xff]
    %v41 = vld [vmem:[#allocation5 + $0x8] sm:$0xff]
    %vm42 = vcmp.ge.u32.totalorder %v40, 2147483648
    %vm43 = vcmp.ge.u32.totalorder %v41, 2147483648
    %v44 = vld [vmem:[#allocation2] sm:$0xff]
    %v45 = vld [vmem:[#allocation2 + $0x8] sm:$0xff]
    %v46 = vmul.f32 %v44, 2.0
    %v47 = vmul.f32 %v45, 2.0
    %v48 = vsel %vm42, %v46, 0.0
    %v49 = vsel %vm43, %v47, 0.0
    %50 = vst [vmem:[#allocation7] sm:$0xff] %v48
    %51 = vst [vmem:[#allocation7 + $0x8] sm:$0xff] %v49
    // Predicated region
    $region18: #{tpu_custom_call.1} parent=1 // pred_check
      _
    $region19: #{tpu_custom_call.1} parent=1 // pred_check_branch
      %53 = sbr.rel (0) target = $region21
    $region20: #{tpu_custom_call.1} parent=1 // pred_region
      %s55 = ssub.s32 256, 256
      %56 = vsyncadd [#allocation4], %s55
      %s57 = sshll.u32 [#allocation7], 4
      %s58 = int_to_ptr.vmem [resolvable:$true] %s57
      %63 = dma.vmem_to_hbm [thread:$0]  %s58, 256, %s2, [#allocation4], 128, 128, 8
    $region21: #{tpu_custom_call.1} parent=1 // pred_fallthru
      _
    // Predicated region
    $region22: #{tpu_custom_call.1} parent=1 // pred_check
      _
    $region23: #{tpu_custom_call.1} parent=1 // pred_check_branch
      %65 = sbr.rel (0) target = $region25
    $region24: #{tpu_custom_call.1} parent=1 // pred_region
      %66 = dma.done [#allocation4], 256
    $region25: #{tpu_custom_call.1} parent=1 // pred_fallthru
      _
    %67 = vsyncpa [#allocation3], 1
    %68 = vsyncpa [#allocation6], 1
    %69 = vsyncpa [#allocation4], 1

</llo_original>
